<compile_context>
chip_gen: v6e
topology: v6e:2x2x1
jax: 0.10.0
libtpu: 0.0.40
codegen_flags: <defaults>
</compile_context>

<pallas_src>
import functools

import jax
import jax.numpy as jnp
from jax.experimental import pallas as pl
from jax.experimental.pallas import tpu as pltpu


class WrapFunction:
    """JAX equivalent of mmcv's WrapFunction(nn.Module): forwards to fn."""

    def __init__(self, wrapped_function):
        self.wrapped_function = wrapped_function

    def __call__(self, *args, **kwargs):
        return self.wrapped_function(*args, **kwargs)


def _round_up(v, m):
    return (v + m - 1) // m * m


# ----------------------------------------------------------------------------
# Pallas kernel: instance norm over a (tile_nc, HW) tile of rows.
# ----------------------------------------------------------------------------
def _instance_norm_kernel(x_ref, g_ref, b_ref, o_ref, *, eps, inv_hw):
    # Block last dim equals the full HW, so there are no logically-padded
    # lanes here; Mosaic masks its own internal lane padding in reductions.
    x = x_ref[...].astype(jnp.float32)                         # (tile_nc, HW)

    # Two-pass (centered) statistics: parity with torch.nn.InstanceNorm2d
    # (biased variance), no E[x^2]-E[x]^2 cancellation.
    mean = jnp.sum(x, axis=-1, keepdims=True) * inv_hw          # (tile_nc, 1)
    xc = x - mean
    var = jnp.sum(xc * xc, axis=-1, keepdims=True) * inv_hw     # (tile_nc, 1)

    # Fold gamma into the rsqrt scale and mean into the shift: the store is a
    # single broadcasted FMA on x (no extra full-width temporaries needed).
    scale = jax.lax.rsqrt(var + eps) * g_ref[...]               # (tile_nc, 1)
    shift = b_ref[...] - mean * scale                           # (tile_nc, 1)
    o_ref[...] = (x * scale + shift).astype(o_ref.dtype)


# Block-size policy: ~4 MiB input blocks (pipeline sweet spot on v6e, bigger
# helps v7x amortize step overhead, still VMEM-safe on v5e with an explicit
# vmem_limit).  A single 8-row block larger than 6 MiB is rejected so the full
# live set (in/out double buffers + temporaries) never threatens v7x's 64 MiB.
_TARGET_BLOCK_BYTES = 4 * 1024 * 1024
_MAX_BLOCK_BYTES = 6 * 1024 * 1024


def instance_norm_pallas(x, gamma, beta, eps=1e-5):
    """x: NCHW float32, gamma/beta: (C,). Matches nn.InstanceNorm2d(C, affine=True, eps)."""
    N, C, H, W = x.shape
    NC, HW = N * C, H * W

    # Physical lane footprint of one row (Mosaic pads lanes to 128 internally).
    hw_lanes = _round_up(HW, 128)
    if 8 * hw_lanes * 4 > _MAX_BLOCK_BYTES:
        # TODO(synk): split HW over a second 'arbitrary' grid axis (sum/sumsq
        # accumulation pass + apply pass) for very large spatial sizes.
        raise NotImplementedError(
            f"H*W={HW} too large for a single-row-block instance-norm kernel")

    # ---- tiling over the N*C row axis --------------------------------------
    # Largest tile allowed by the per-block byte budget.
    tile_cap = max(8, (_TARGET_BLOCK_BYTES // (hw_lanes * 4)) // 8 * 8)
    # Enough tiles to (a) respect the byte budget and (b) give the software
    # pipeline / the 2 TensorCores on v7x work to overlap (>= 8 steps when NC
    # allows), then balance tiles so the ragged last tile wastes < 8 rows.
    num_tiles = max(pl.cdiv(NC, tile_cap), min(8, pl.cdiv(NC, 8)))
    tile_nc = _round_up(pl.cdiv(NC, num_tiles), 8)
    grid = (pl.cdiv(NC, tile_nc),)

    # No HBM-level padding passes: reshape only (pure metadata for NCHW->2D).
    x2d = x.reshape(NC, HW)
    g_row = jnp.tile(gamma.astype(jnp.float32), (N,)).reshape(NC, 1)
    b_row = jnp.tile(beta.astype(jnp.float32), (N,)).reshape(NC, 1)

    kernel = functools.partial(
        _instance_norm_kernel, eps=float(eps), inv_hw=1.0 / HW)

    # VMEM accounting: double-buffered in + out blocks (4x block), ~3x block of
    # in-kernel f32 temporaries (x, xc, store value), double-buffered gamma /
    # beta column blocks (128-lane padded), plus slack.  Clamped below v7x's
    # 64 MiB physical VMEM; lower bound keeps v5e's 16 MiB default from biting.
    block_bytes = tile_nc * hw_lanes * 4
    gb_bytes = 2 * 2 * tile_nc * 128 * 4
    vmem_bytes = min(max(7 * block_bytes + gb_bytes + (2 << 20), 16 << 20),
                     56 << 20)

    out2d = pl.pallas_call(
        kernel,
        out_shape=jax.ShapeDtypeStruct((NC, HW), x.dtype),
        grid=grid,
        in_specs=[
            pl.BlockSpec((tile_nc, HW), lambda i: (i, 0)),
            pl.BlockSpec((tile_nc, 1), lambda i: (i, 0)),
            pl.BlockSpec((tile_nc, 1), lambda i: (i, 0)),
        ],
        out_specs=pl.BlockSpec((tile_nc, HW), lambda i: (i, 0)),
        compiler_params=pltpu.CompilerParams(
            dimension_semantics=("parallel",),
            vmem_limit_bytes=vmem_bytes,
        ),
    )(x2d, g_row, b_row)

    return out2d.reshape(N, C, H, W)


def instance_norm_ref(x, gamma, beta, eps=1e-5):
    """Plain-JAX reference (matches torch.nn.InstanceNorm2d(affine=True))."""
    mean = jnp.mean(x, axis=(2, 3), keepdims=True)
    var = jnp.mean((x - mean) ** 2, axis=(2, 3), keepdims=True)
    y = (x - mean) / jnp.sqrt(var + eps)
    return y * gamma[None, :, None, None] + beta[None, :, None, None]


if __name__ == "__main__":
    key = jax.random.PRNGKey(0)

    N, C, H, W = 2, 4, 16, 16
    x = jax.random.normal(key, (N, C, H, W), dtype=jnp.float32)

    # Deterministic affine parameters (InstanceNorm2d(C, affine=True)).
    gamma = 1.0 + 0.1 * jnp.arange(C, dtype=jnp.float32)
    beta = 0.05 * jnp.arange(C, dtype=jnp.float32)

    # WrapFunction wrapping the Pallas-backed instance norm, like the test does.
    wrapped_model = WrapFunction(
        lambda inp: instance_norm_pallas(inp, gamma, beta))

    out = jax.block_until_ready(wrapped_model(x))
    ref = instance_norm_ref(x, gamma, beta)
    assert out.shape == (N, C, H, W)
    assert jnp.max(jnp.abs(out - ref)) < 1e-4

    # Lane-ragged spatial size (H*W not a multiple of 128).
    x2 = jax.random.normal(jax.random.PRNGKey(1), (2, 4, 7, 7), jnp.float32)
    out2 = jax.block_until_ready(instance_norm_pallas(x2, gamma, beta))
    assert jnp.max(jnp.abs(out2 - instance_norm_ref(x2, gamma, beta))) < 1e-4

    # Row-ragged case: N*C not a multiple of the row tile (multi-step grid and
    # masked writeback of the final, partially out-of-bounds row tile).
    C3 = 5
    gamma3 = 1.0 + 0.1 * jnp.arange(C3, dtype=jnp.float32)
    beta3 = 0.05 * jnp.arange(C3, dtype=jnp.float32)
    x3 = jax.random.normal(jax.random.PRNGKey(2), (2, C3, 7, 7), jnp.float32)
    out3 = jax.block_until_ready(instance_norm_pallas(x3, gamma3, beta3))
    assert jnp.max(jnp.abs(out3 - instance_norm_ref(x3, gamma3, beta3))) < 1e-4

    print("KERNEL_OK")
</pallas_src>

<mosaic_0001>
module attributes {stable_mosaic.version = 11 : i64} {
  func.func @_instance_norm_kernel(%arg0: i32, %arg1: memref<8x256xf32, #tpu.memory_space<vmem>>, %arg2: memref<8x1xf32, #tpu.memory_space<vmem>>, %arg3: memref<8x1xf32, #tpu.memory_space<vmem>>, %arg4: memref<8x256xf32, #tpu.memory_space<vmem>>) attributes {dimension_semantics = [#tpu.dimension_semantics<parallel>], iteration_bounds = array<i64: 1>, scalar_prefetch = 0 : i64, scratch_operands = 0 : i64, tpu.core_type = #tpu.core_type<tc>, window_params = [{transform_indices = @transform_0, window_bounds = array<i64: 8, 256>}, {transform_indices = @transform_1, window_bounds = array<i64: 8, 1>}, {transform_indices = @transform_2, window_bounds = array<i64: 8, 1>}, {transform_indices = @transform_3, window_bounds = array<i64: 8, 256>}]} {
    %c0 = arith.constant 0 : index
    %c0_0 = arith.constant 0 : index
    %0 = vector.load %arg1[%c0, %c0_0] : memref<8x256xf32, #tpu.memory_space<vmem>>, vector<8x256xf32>
    %cst = arith.constant dense<0.000000e+00> : vector<8xf32>
    %1 = vector.multi_reduction <add>, %0, %cst [1] : vector<8x256xf32> to vector<8xf32>
    %2 = vector.shape_cast %1 : vector<8xf32> to vector<8x1xf32>
    %cst_1 = arith.constant 3.906250e-03 : f32
    %3 = vector.broadcast %cst_1 : f32 to vector<8x1xf32>
    %4 = arith.mulf %2, %3 : vector<8x1xf32>
    %5 = vector.broadcast %4 : vector<8x1xf32> to vector<8x256xf32>
    %6 = arith.subf %0, %5 : vector<8x256xf32>
    %7 = arith.mulf %6, %6 : vector<8x256xf32>
    %cst_2 = arith.constant dense<0.000000e+00> : vector<8xf32>
    %8 = vector.multi_reduction <add>, %7, %cst_2 [1] : vector<8x256xf32> to vector<8xf32>
    %9 = vector.shape_cast %8 : vector<8xf32> to vector<8x1xf32>
    %cst_3 = arith.constant 3.906250e-03 : f32
    %10 = vector.broadcast %cst_3 : f32 to vector<8x1xf32>
    %11 = arith.mulf %9, %10 : vector<8x1xf32>
    %cst_4 = arith.constant 9.99999974E-6 : f32
    %12 = vector.broadcast %cst_4 : f32 to vector<8x1xf32>
    %13 = arith.addf %11, %12 : vector<8x1xf32>
    %14 = math.rsqrt %13 : vector<8x1xf32>
    %c0_5 = arith.constant 0 : index
    %c0_6 = arith.constant 0 : index
    %15 = vector.load %arg2[%c0_5, %c0_6] : memref<8x1xf32, #tpu.memory_space<vmem>>, vector<8x1xf32>
    %16 = arith.mulf %14, %15 : vector<8x1xf32>
    %c0_7 = arith.constant 0 : index
    %c0_8 = arith.constant 0 : index
    %17 = vector.load %arg3[%c0_7, %c0_8] : memref<8x1xf32, #tpu.memory_space<vmem>>, vector<8x1xf32>
    %18 = arith.mulf %4, %16 : vector<8x1xf32>
    %19 = arith.subf %17, %18 : vector<8x1xf32>
    %20 = vector.broadcast %16 : vector<8x1xf32> to vector<8x256xf32>
    %21 = arith.mulf %0, %20 : vector<8x256xf32>
    %22 = vector.broadcast %19 : vector<8x1xf32> to vector<8x256xf32>
    %23 = arith.addf %21, %22 : vector<8x256xf32>
    %c0_9 = arith.constant 0 : index
    %c0_10 = arith.constant 0 : index
    %24 = vector.load %arg4[%c0_9, %c0_10] : memref<8x256xf32, #tpu.memory_space<vmem>>, vector<8x256xf32>
    tpu.vector_store %arg4[%c0_9, %c0_10], %23 {strides = array<i32>} : memref<8x256xf32, #tpu.memory_space<vmem>>, vector<8x256xf32>,
    return
  }
  func.func @transform_0(%arg0: i32) -> (i32, i32) {
    %c0_i32 = arith.constant 0 : i32
    %c0_i32_0 = arith.constant 0 : i32
    return %arg0, %c0_i32 : i32, i32
  }
  func.func @transform_1(%arg0: i32) -> (i32, i32) {
    %c0_i32 = arith.constant 0 : i32
    %c0_i32_0 = arith.constant 0 : i32
    return %arg0, %c0_i32 : i32, i32
  }
  func.func @transform_2(%arg0: i32) -> (i32, i32) {
    %c0_i32 = arith.constant 0 : i32
    %c0_i32_0 = arith.constant 0 : i32
    return %arg0, %c0_i32 : i32, i32
  }
  func.func @transform_3(%arg0: i32) -> (i32, i32) {
    %c0_i32 = arith.constant 0 : i32
    %c0_i32_0 = arith.constant 0 : i32
    return %arg0, %c0_i32 : i32, i32
  }
}

</mosaic_0001>

<llo_original>
// kernel: tpu_custom_call.1
$region0: #{tpu_custom_call.1}
  #allocation0 [shape = 'u32[]', space=smem, size = 0x4, offset = 0x4, fixed_abs, tag = 'smem constant byte address 0x4 - core index']
  #allocation1 [shape = 'u32[144,128]{1,0:T(1,128)}', space=vmem, size = 0x12000, scoped, tag = 'internal scratch']
  %s0 = inlined_call_operand.vmem [shape: f32[8,256], index: 0, kind: input, shape index: {}]
  %s1 = inlined_call_operand.vmem [shape: f32[8,1], index: 1, kind: input, shape index: {}]
  %s2 = inlined_call_operand.vmem [shape: f32[8,1], index: 2, kind: input, shape index: {}]
  %s3 = inlined_call_operand.hbm [shape: f32[8,256], index: 3, kind: output, shape index: {}]
  %s4 = sld [smem:[#allocation0]]
  $region22: #{tpu_custom_call.1} parent=0
    _
  %s6 = ssub.s32 1, %s4
  %s7 = scalar_select 0, %s6, %s4
  $region1: #{tpu_custom_call.1} parent=0
    #allocation2 [shape = 'u8[8192]{0}', space=vmem, size = 0x2000, scoped, tag = 'output window, operand 0, single buffered']
    #allocation3 [shape = 's32[1]{0}', space=sflag, size = 0x4, scoped, tag = 'scoped memory for tpu_custom_call.1']
    %8 = vsyncpa [#allocation3], 0
    // Predicated region
    $region2: #{tpu_custom_call.1} parent=1 // pred_check
      _
    $region3: #{tpu_custom_call.1} parent=1 // pred_check_branch
      %10 = sbr.rel (0) target = $region5
    $region4: #{tpu_custom_call.1} parent=1 // pred_region
      _
    $region5: #{tpu_custom_call.1} parent=1 // pred_fallthru
      _
    // Predicated region
    $region6: #{tpu_custom_call.1} parent=1 // pred_check
      _
    $region7: #{tpu_custom_call.1} parent=1 // pred_check_branch
      %12 = sbr.rel (0) target = $region9
    $region8: #{tpu_custom_call.1} parent=1 // pred_region
      _
    $region9: #{tpu_custom_call.1} parent=1 // pred_fallthru
      _
    // Predicated region
    $region10: #{tpu_custom_call.1} parent=1 // pred_check
      _
    $region11: #{tpu_custom_call.1} parent=1 // pred_check_branch
      %14 = sbr.rel (0) target = $region13
    $region12: #{tpu_custom_call.1} parent=1 // pred_region
      _
    $region13: #{tpu_custom_call.1} parent=1 // pred_fallthru
      _
    %v15 = vld [vmem:[%s0] sm:$0xff]
    %v16 = vld [vmem:[%s0 + $0x8] sm:$0xff]
    %v17 = vadd.f32 %v15, %v16
    %18 = vadd.xlane.f32.xlu0 %v17
    %v19 = vpop.xlane.xlu0 %18
    %v20 = vmul.f32 %v19, 0.00390625
    %v21 = vsub.f32 %v15, %v20
    %v22 = vsub.f32 %v16, %v20
    %v23 = vmul.f32 %v21, %v21
    %v24 = vmul.f32 %v22, %v22
    %v25 = vadd.f32 %v23, %v24
    %26 = vadd.xlane.f32.xlu0 %v25
    %v27 = vpop.xlane.xlu0 %26
    %v28 = vmul.f32 %v27, 0.00390625
    %v29 = vadd.f32 %v28, 1e-05
    %v30 = vrsqrt.pop %v29
    %v31 = vld [vmem:[%s1] sm:$0xff]
    %v32 = vmul.f32 %v30, %v31
    %v33 = vld [vmem:[%s2] sm:$0xff]
    %v34 = vmul.f32 %v20, %v32
    %v35 = vsub.f32 %v33, %v34
    %37 = vset.pattern.permute.xlu0 0
    %38 = vperm.xlu0 %37, %v32
    %v39 = vpop.permute.xlu0 %38
    %v41 = vmul.f32 %v15, %v39
    %v42 = vmul.f32 %v16, %v39
    %44 = vset.pattern.permute.xlu0 0
    %45 = vperm.xlu0 %44, %v35
    %v46 = vpop.permute.xlu0 %45
    %v48 = vadd.f32 %v41, %v46
    %v49 = vadd.f32 %v42, %v46
    %50 = vst [vmem:[#allocation2] sm:$0xff] %v48
    %51 = vst [vmem:[#allocation2 + $0x8] sm:$0xff] %v49
    // Predicated region
    $region14: #{tpu_custom_call.1} parent=1 // pred_check
      _
    $region15: #{tpu_custom_call.1} parent=1 // pred_check_branch
      %53 = sbr.rel (0) target = $region17
    $region16: #{tpu_custom_call.1} parent=1 // pred_region
      %s55 = ssub.s32 256, 256
      %56 = vsyncadd [#allocation3], %s55
      %s58 = sshll.u32 [#allocation2], 4
      %s59 = int_to_ptr.vmem [resolvable:$true] %s58
      %61 = dma.vmem_to_hbm [thread:$0]  %s59, 256, %s3, [#allocation3]
    $region17: #{tpu_custom_call.1} parent=1 // pred_fallthru
      _
    // Predicated region
    $region18: #{tpu_custom_call.1} parent=1 // pred_check
      _
    $region19: #{tpu_custom_call.1} parent=1 // pred_check_branch
      %63 = sbr.rel (0) target = $region21
    $region20: #{tpu_custom_call.1} parent=1 // pred_region
      %64 = dma.done [#allocation3], 256
    $region21: #{tpu_custom_call.1} parent=1 // pred_fallthru
      _
    %65 = vsyncpa [#allocation3], 1

</llo_original>
